<compile_context>
chip_gen: v6e
topology: v6e:2x2x1
jax: 0.10.0
libtpu: 0.0.40
codegen_flags: <defaults>
</compile_context>

<pallas_src>
import functools
import math

import jax
import jax.numpy as jnp
from jax.experimental import pallas as pl
from jax.experimental.pallas import tpu as pltpu

_SMEM = pl.BlockSpec(memory_space=pltpu.MemorySpace.SMEM)
_INV_SQRT2 = 1.0 / math.sqrt(2.0)


def _pick_tile(dim, candidates):
    """Largest candidate tile that evenly divides `dim`; else the full dim (tiny cases)."""
    for c in candidates:
        if dim >= c and dim % c == 0:
            return c
    return dim


# --------------------------------------------------------------------------------------
# Kernel 1: tiled linear  y = x @ W + b  (optionally fused exact erf-GELU, as F.gelu).
# --------------------------------------------------------------------------------------
def _linear_kernel(x_ref, w_ref, b_ref, o_ref, acc_ref, *, gelu):
    @pl.when(pl.program_id(2) == 0)
    def _init():
        acc_ref[...] = jnp.zeros_like(acc_ref)

    acc_ref[...] += jnp.dot(x_ref[...], w_ref[...], preferred_element_type=jnp.float32)

    @pl.when(pl.program_id(2) == pl.num_programs(2) - 1)
    def _finish():
        y = acc_ref[...] + b_ref[...]
        if gelu:
            y = 0.5 * y * (1.0 + jax.lax.erf(y * _INV_SQRT2))
        o_ref[...] = y


def pallas_linear(x, w, b, gelu=False):
    m, k_dim = x.shape
    n = w.shape[1]
    tm = _pick_tile(m, (256, 128))
    tn = _pick_tile(n, (512, 256, 128))
    tk = _pick_tile(k_dim, (512, 256, 128))
    grid = (m // tm, n // tn, k_dim // tk)
    cost = pl.CostEstimate(
        flops=int(2 * m * n * k_dim),
        transcendentals=int(m * n) if gelu else 0,
        bytes_accessed=int(4 * (m * k_dim + k_dim * n + m * n)),
    )
    return pl.pallas_call(
        functools.partial(_linear_kernel, gelu=gelu),
        out_shape=jax.ShapeDtypeStruct((m, n), jnp.float32),
        grid=grid,
        in_specs=[
            pl.BlockSpec((tm, tk), lambda i, j, k: (i, k)),   # x
            pl.BlockSpec((tk, tn), lambda i, j, k: (k, j)),   # W
            pl.BlockSpec((1, tn), lambda i, j, k: (0, j)),    # b
        ],
        out_specs=pl.BlockSpec((tm, tn), lambda i, j, k: (i, j)),
        scratch_shapes=[pltpu.VMEM((tm, tn), jnp.float32)],
        compiler_params=pltpu.CompilerParams(
            dimension_semantics=("parallel", "parallel", "arbitrary")),
        cost_estimate=cost,
    )(x, w, b)


# --------------------------------------------------------------------------------------
# Kernel 2: per-edge-type heterogeneous attention over lane-dense (N, n_hid) slabs.
#   Inputs already carry the relation transforms:
#     k' = (W_k x + b_k) @ blockdiag(rel_att * pri/sqrt(dk)),  v' = (...) @ blockdiag(rel_msg)
#   Per head: s = q_h @ k'_h.T + bias;   p = exp(s - max);   t_h = (p @ v'_h) / sum(p)
#   Zero-in-degree dst rows are zeroed via `valid` (matches DGL edge_softmax + sum).
# --------------------------------------------------------------------------------------
def _edge_attn_kernel(q_ref, k_ref, v_ref, bias_ref, valid_ref, o_ref, *, n_heads, d_k):
    q = q_ref[...]        # (td, n_hid)
    kmat = k_ref[...]     # (n_src, n_hid)  rel_att & pri/sqrt(dk) pre-folded
    vmat = v_ref[...]     # (n_src, n_hid)  rel_msg pre-folded
    bias = bias_ref[...]  # (td, n_src)     0 on edges, -1e30 on non-edges

    outs = []
    for h in range(n_heads):        # static unroll; static lane slices
        lo = h * d_k
        qh = q[:, lo:lo + d_k]
        kh = kmat[:, lo:lo + d_k]
        vh = vmat[:, lo:lo + d_k]
        s = jax.lax.dot_general(qh, kh, (((1,), (1,)), ((), ())),
                                preferred_element_type=jnp.float32) + bias   # (td, Ns)
        m = jnp.max(s, axis=-1, keepdims=True)
        p = jnp.exp(s - m)                               # masked entries underflow to 0
        denom = jnp.sum(p, axis=-1, keepdims=True)
        th = jnp.dot(p, vh, preferred_element_type=jnp.float32)              # (td, dk)
        outs.append(th * pl.reciprocal(denom, approx=True))                  # deferred norm

    o_ref[...] = jnp.concatenate(outs, axis=-1) * valid_ref[...]             # lane-dense store


def pallas_edge_attention(q, kp, vp, bias, valid, n_heads):
    n_dst, n_hid = q.shape
    n_src = kp.shape[0]
    d_k = n_hid // n_heads
    td = _pick_tile(n_dst, (256, 128))
    cost = pl.CostEstimate(
        flops=int(4 * n_dst * n_src * n_hid),
        transcendentals=int(n_heads * n_dst * n_src),
        bytes_accessed=int(4 * (2 * n_dst * n_hid + 2 * n_src * n_hid + n_dst * n_src + n_dst)),
    )
    return pl.pallas_call(
        functools.partial(_edge_attn_kernel, n_heads=n_heads, d_k=d_k),
        out_shape=jax.ShapeDtypeStruct((n_dst, n_hid), jnp.float32),
        grid=(n_dst // td,),
        in_specs=[
            pl.BlockSpec((td, n_hid), lambda i: (i, 0)),      # q (dst tile)
            pl.BlockSpec((n_src, n_hid), lambda i: (0, 0)),   # k' (resident)
            pl.BlockSpec((n_src, n_hid), lambda i: (0, 0)),   # v' (resident)
            pl.BlockSpec((td, n_src), lambda i: (i, 0)),      # additive mask bias
            pl.BlockSpec((td, 1), lambda i: (i, 0)),          # in-degree validity
        ],
        out_specs=pl.BlockSpec((td, n_hid), lambda i: (i, 0)),
        compiler_params=pltpu.CompilerParams(dimension_semantics=("parallel",)),
        cost_estimate=cost,
    )(q, kp, vp, bias, valid)


# --------------------------------------------------------------------------------------
# Kernel 3: target-specific aggregation, row-tiled:
#   out = LayerNorm( sigmoid(skip) * (t @ W_a + b_a) + (1 - sigmoid(skip)) * h_prev )
# --------------------------------------------------------------------------------------
def _target_agg_kernel(alpha_ref, t_ref, w_ref, b_ref, hprev_ref, g_ref, beta_ref, o_ref):
    alpha = alpha_ref[0]
    trans = jnp.dot(t_ref[...], w_ref[...], preferred_element_type=jnp.float32) + b_ref[...]
    # TODO(synk): nn.Dropout(0.2) is identity in eval mode; training-mode dropout not implemented.
    x = hprev_ref[...] + (trans - hprev_ref[...]) * alpha
    mu = jnp.mean(x, axis=-1, keepdims=True)
    var = jnp.mean((x - mu) ** 2, axis=-1, keepdims=True)
    o_ref[...] = (x - mu) * jax.lax.rsqrt(var + 1e-5) * g_ref[...] + beta_ref[...]


def pallas_target_agg(alpha, t, w, b, h_prev, gamma, beta):
    n, d = t.shape
    tm = _pick_tile(n, (256, 128))
    return pl.pallas_call(
        _target_agg_kernel,
        out_shape=jax.ShapeDtypeStruct((n, d), jnp.float32),
        grid=(n // tm,),
        in_specs=[
            _SMEM,                                        # alpha scalar
            pl.BlockSpec((tm, d), lambda i: (i, 0)),      # t (row tile)
            pl.BlockSpec((d, d), lambda i: (0, 0)),       # W_a (resident)
            pl.BlockSpec((1, d), lambda i: (0, 0)),       # b_a
            pl.BlockSpec((tm, d), lambda i: (i, 0)),      # h_prev
            pl.BlockSpec((1, d), lambda i: (0, 0)),       # LN gamma
            pl.BlockSpec((1, d), lambda i: (0, 0)),       # LN beta
        ],
        out_specs=pl.BlockSpec((tm, d), lambda i: (i, 0)),
        compiler_params=pltpu.CompilerParams(dimension_semantics=("parallel",)),
    )(alpha, t, w, b, h_prev, gamma, beta)


# --------------------------------------------------------------------------------------
# Model glue (plain JAX): parameter setup, relation block-diagonals, cross-etype mean.
# --------------------------------------------------------------------------------------
def _blockdiag(rel):
    """(H, dk, dk) per-head matrices -> (H*dk, H*dk) block-diagonal weight."""
    h, dk, _ = rel.shape
    eye = jnp.eye(h, dtype=rel.dtype)
    return jnp.einsum("hij,hg->higj", rel, eye).reshape(h * dk, h * dk)


def hgt_layer_forward(lp, h, ebias, evalid, node_dict, edge_dict, n_heads):
    n_hid = lp["k_w"][0].shape[1]
    d_k = n_hid // n_heads
    inv_sqrt_dk = 1.0 / math.sqrt(d_k)
    zero_bias = jnp.zeros((1, n_hid), jnp.float32)

    # Hoisted + fused Q/K/V projections: one wide matmul per node type, reused by all etypes.
    q, k, v = {}, {}, {}
    for ntype, n_id in node_dict.items():
        w_qkv = jnp.concatenate([lp["q_w"][n_id], lp["k_w"][n_id], lp["v_w"][n_id]], axis=1)
        b_qkv = jnp.concatenate([lp["q_b"][n_id], lp["k_b"][n_id], lp["v_b"][n_id]], axis=1)
        qkv = pallas_linear(h[ntype], w_qkv, b_qkv)          # (N, 3*n_hid)
        q[ntype] = qkv[:, :n_hid]
        k[ntype] = qkv[:, n_hid:2 * n_hid]
        v[ntype] = qkv[:, 2 * n_hid:]

    agg = {ntype: [] for ntype in node_dict}
    for can_etype, e_id in edge_dict.items():
        srctype, _, dsttype = can_etype
        # pri[h]/sqrt(dk) folded into the rel_att block-diagonal (scales k', exact).
        att = lp["rel_att"][e_id] * (lp["rel_pri"][e_id] * inv_sqrt_dk)[:, None, None]
        kp = pallas_linear(k[srctype], _blockdiag(att), zero_bias)
        vp = pallas_linear(v[srctype], _blockdiag(lp["rel_msg"][e_id]), zero_bias)
        t = pallas_edge_attention(q[dsttype], kp, vp,
                                  ebias[can_etype], evalid[can_etype], n_heads)
        agg[dsttype].append(t)

    new_h = {}
    for ntype, n_id in node_dict.items():
        # DGL multi_update_all(..., cross_reducer='mean')
        t = agg[ntype][0] if len(agg[ntype]) == 1 else jnp.mean(jnp.stack(agg[ntype], 0), 0)
        alpha = jax.nn.sigmoid(lp["skip"][n_id:n_id + 1])    # (1,), lives in SMEM
        new_h[ntype] = pallas_target_agg(
            alpha, t, lp["a_w"][n_id], lp["a_b"][n_id],
            h[ntype], lp["ln_g"][n_id], lp["ln_b"][n_id])
    return new_h


def hgt_forward(params, feats, masks, node_dict, edge_dict, n_heads, out_key):
    # Precompute additive mask bias (0 / -1e30) and per-dst in-degree validity once.
    ebias = {et: jnp.where(m > 0.0, 0.0, -1e30).astype(jnp.float32)
             for et, m in masks.items()}
    evalid = {et: (jnp.sum(m, axis=1, keepdims=True) > 0.0).astype(jnp.float32)
              for et, m in masks.items()}

    h = {}
    for ntype, n_id in node_dict.items():
        h[ntype] = pallas_linear(feats[ntype], params["adapt_w"][n_id],
                                 params["adapt_b"][n_id], gelu=True)
    for lp in params["layers"]:
        h = hgt_layer_forward(lp, h, ebias, evalid, node_dict, edge_dict, n_heads)
    return pallas_linear(h[out_key], params["out_w"], params["out_b"])


def _uniform(key, shape, bound):
    return jax.random.uniform(key, shape, jnp.float32, -bound, bound)


def init_params(key, node_dict, edge_dict, n_inp, n_hid, n_out, n_layers, n_heads):
    num_types, num_rel = len(node_dict), len(edge_dict)
    d_k = n_hid // n_heads
    keys = iter(jax.random.split(key, 4096))

    def linear(din, dout):
        bound = 1.0 / math.sqrt(din)
        return _uniform(next(keys), (din, dout), bound), _uniform(next(keys), (1, dout), bound)

    adapt = [linear(n_inp, n_hid) for _ in range(num_types)]
    params = {"adapt_w": [w for w, _ in adapt], "adapt_b": [b for _, b in adapt], "layers": []}

    xav = math.sqrt(6.0 / (d_k + d_k))
    for _ in range(n_layers):
        k_l = [linear(n_hid, n_hid) for _ in range(num_types)]
        q_l = [linear(n_hid, n_hid) for _ in range(num_types)]
        v_l = [linear(n_hid, n_hid) for _ in range(num_types)]
        a_l = [linear(n_hid, n_hid) for _ in range(num_types)]
        params["layers"].append({
            "k_w": [w for w, _ in k_l], "k_b": [b for _, b in k_l],
            "q_w": [w for w, _ in q_l], "q_b": [b for _, b in q_l],
            "v_w": [w for w, _ in v_l], "v_b": [b for _, b in v_l],
            "a_w": [w for w, _ in a_l], "a_b": [b for _, b in a_l],
            "rel_att": _uniform(next(keys), (num_rel, n_heads, d_k, d_k), xav),
            "rel_msg": _uniform(next(keys), (num_rel, n_heads, d_k, d_k), xav),
            "rel_pri": jnp.ones((num_rel, n_heads), jnp.float32),
            "skip": jnp.ones((num_types,), jnp.float32),
            "ln_g": [jnp.ones((1, n_hid), jnp.float32) for _ in range(num_types)],
            "ln_b": [jnp.zeros((1, n_hid), jnp.float32) for _ in range(num_types)],
        })
    ow, ob = linear(n_hid, n_out)
    params["out_w"], params["out_b"] = ow, ob
    return params


if __name__ == "__main__":
    node_dict = {"author": 0, "paper": 1}
    edge_dict = {("author", "writes", "paper"): 0,
                 ("paper", "written_by", "author"): 1}
    num_nodes = {"author": 8, "paper": 16}
    n_inp, n_hid, n_out, n_layers, n_heads = 16, 32, 8, 2, 4

    root = jax.random.PRNGKey(0)
    k_params, k_fa, k_fp, k_a0, k_a1 = jax.random.split(root, 5)

    params = init_params(k_params, node_dict, edge_dict,
                         n_inp, n_hid, n_out, n_layers, n_heads)

    feats = {
        "author": jax.random.normal(k_fa, (num_nodes["author"], n_inp), jnp.float32),
        "paper": jax.random.normal(k_fp, (num_nodes["paper"], n_inp), jnp.float32),
    }

    def make_mask(key, n_dst, n_src):
        m = jax.random.bernoulli(key, 0.4, (n_dst, n_src)).astype(jnp.float32)
        return jnp.maximum(m, jnp.zeros((n_dst, n_src), jnp.float32).at[:, 0].set(1.0))

    masks = {
        ("author", "writes", "paper"):
            make_mask(k_a0, num_nodes["paper"], num_nodes["author"]),
        ("paper", "written_by", "author"):
            make_mask(k_a1, num_nodes["author"], num_nodes["paper"]),
    }

    out = hgt_forward(params, feats, masks, node_dict, edge_dict, n_heads, out_key="paper")
    out = jax.block_until_ready(out)
    assert out.shape == (num_nodes["paper"], n_out)
    assert bool(jnp.all(jnp.isfinite(out)))
    print("KERNEL_OK")
</pallas_src>

<mosaic_0001>
module attributes {stable_mosaic.version = 11 : i64} {
  func.func @_linear_kernel(%arg0: i32, %arg1: i32, %arg2: i32, %arg3: memref<8x16xf32, #tpu.memory_space<vmem>>, %arg4: memref<16x32xf32, #tpu.memory_space<vmem>>, %arg5: memref<1x32xf32, #tpu.memory_space<vmem>>, %arg6: memref<8x32xf32, #tpu.memory_space<vmem>>, %arg7: memref<8x32xf32, #tpu.memory_space<vmem>>) attributes {dimension_semantics = [#tpu.dimension_semantics<parallel>, #tpu.dimension_semantics<parallel>, #tpu.dimension_semantics<arbitrary>], iteration_bounds = array<i64: 1, 1, 1>, scalar_prefetch = 0 : i64, scratch_operands = 1 : i64, tpu.core_type = #tpu.core_type<tc>, window_params = [{transform_indices = @transform_0, window_bounds = array<i64: 8, 16>}, {transform_indices = @transform_1, window_bounds = array<i64: 16, 32>}, {transform_indices = @transform_2, window_bounds = array<i64: 1, 32>}, {transform_indices = @transform_3, window_bounds = array<i64: 8, 32>}]} {
    %c0_i32 = arith.constant 0 : i32
    %0 = arith.cmpi eq, %arg2, %c0_i32 : i32
    %1 = arith.extui %0 : i1 to i32
    %c0_i32_0 = arith.constant 0 : i32
    %2 = arith.cmpi ne, %1, %c0_i32_0 : i32
    scf.if %2 {
      %cst_10 = arith.constant 0.000000e+00 : f32
      %12 = vector.broadcast %cst_10 : f32 to vector<8x32xf32>
      %c0_11 = arith.constant 0 : index
      %c0_12 = arith.constant 0 : index
      %13 = vector.load %arg7[%c0_11, %c0_12] : memref<8x32xf32, #tpu.memory_space<vmem>>, vector<8x32xf32>
      tpu.vector_store %arg7[%c0_11, %c0_12], %12 {strides = array<i32>} : memref<8x32xf32, #tpu.memory_space<vmem>>, vector<8x32xf32>,
    } else {
    }
    %c0 = arith.constant 0 : index
    %c0_1 = arith.constant 0 : index
    %3 = vector.load %arg7[%c0, %c0_1] : memref<8x32xf32, #tpu.memory_space<vmem>>, vector<8x32xf32>
    %c0_2 = arith.constant 0 : index
    %c0_3 = arith.constant 0 : index
    %4 = vector.load %arg3[%c0_2, %c0_3] : memref<8x16xf32, #tpu.memory_space<vmem>>, vector<8x16xf32>
    %c0_4 = arith.constant 0 : index
    %c0_5 = arith.constant 0 : index
    %5 = vector.load %arg4[%c0_4, %c0_5] : memref<16x32xf32, #tpu.memory_space<vmem>>, vector<16x32xf32>
    %cst = arith.constant dense<0.000000e+00> : vector<8x32xf32>
    %6 = tpu.matmul %4, %5, %cst {dimension_numbers = #tpu.dot_dimension_numbers<[1], [0], [0], [1], [0, 0, 1, 1], [], []>} : vector<8x16xf32>, vector<16x32xf32>, vector<8x32xf32> -> vector<8x32xf32>
    %7 = arith.addf %3, %6 : vector<8x32xf32>
    %c0_6 = arith.constant 0 : index
    %c0_7 = arith.constant 0 : index
    %8 = vector.load %arg7[%c0_6, %c0_7] : memref<8x32xf32, #tpu.memory_space<vmem>>, vector<8x32xf32>
    tpu.vector_store %arg7[%c0_6, %c0_7], %7 {strides = array<i32>} : memref<8x32xf32, #tpu.memory_space<vmem>>, vector<8x32xf32>,
    %c0_i32_8 = arith.constant 0 : i32
    %9 = arith.cmpi eq, %arg2, %c0_i32_8 : i32
    %10 = arith.extui %9 : i1 to i32
    %c0_i32_9 = arith.constant 0 : i32
    %11 = arith.cmpi ne, %10, %c0_i32_9 : i32
    scf.if %11 {
      %c0_10 = arith.constant 0 : index
      %c0_11 = arith.constant 0 : index
      %12 = vector.load %arg7[%c0_10, %c0_11] : memref<8x32xf32, #tpu.memory_space<vmem>>, vector<8x32xf32>
      %c0_12 = arith.constant 0 : index
      %c0_13 = arith.constant 0 : index
      %13 = vector.load %arg5[%c0_12, %c0_13] : memref<1x32xf32, #tpu.memory_space<vmem>>, vector<1x32xf32>
      %14 = vector.broadcast %13 : vector<1x32xf32> to vector<8x32xf32>
      %15 = arith.addf %12, %14 : vector<8x32xf32>
      %cst_14 = arith.constant 5.000000e-01 : f32
      %16 = vector.broadcast %cst_14 : f32 to vector<8x32xf32>
      %17 = arith.mulf %16, %15 : vector<8x32xf32>
      %cst_15 = arith.constant 0.707106769 : f32
      %18 = vector.broadcast %cst_15 : f32 to vector<8x32xf32>
      %19 = arith.mulf %15, %18 : vector<8x32xf32>
      %20 = math.erf %19 : vector<8x32xf32>
      %cst_16 = arith.constant 1.000000e+00 : f32
      %21 = vector.broadcast %cst_16 : f32 to vector<8x32xf32>
      %22 = arith.addf %21, %20 : vector<8x32xf32>
      %23 = arith.mulf %17, %22 : vector<8x32xf32>
      %c0_17 = arith.constant 0 : index
      %c0_18 = arith.constant 0 : index
      %24 = vector.load %arg6[%c0_17, %c0_18] : memref<8x32xf32, #tpu.memory_space<vmem>>, vector<8x32xf32>
      tpu.vector_store %arg6[%c0_17, %c0_18], %23 {strides = array<i32>} : memref<8x32xf32, #tpu.memory_space<vmem>>, vector<8x32xf32>,
    } else {
    }
    return
  }
  func.func @transform_0(%arg0: i32, %arg1: i32, %arg2: i32) -> (i32, i32) {
    %c0_i32 = arith.constant 0 : i32
    return %arg0, %arg2 : i32, i32
  }
  func.func @transform_1(%arg0: i32, %arg1: i32, %arg2: i32) -> (i32, i32) {
    %c0_i32 = arith.constant 0 : i32
    return %arg2, %arg1 : i32, i32
  }
  func.func @transform_2(%arg0: i32, %arg1: i32, %arg2: i32) -> (i32, i32) {
    %c0_i32 = arith.constant 0 : i32
    %c0_i32_0 = arith.constant 0 : i32
    return %c0_i32, %arg1 : i32, i32
  }
  func.func @transform_3(%arg0: i32, %arg1: i32, %arg2: i32) -> (i32, i32) {
    %c0_i32 = arith.constant 0 : i32
    return %arg0, %arg1 : i32, i32
  }
}

</mosaic_0001>

<llo_original>
// kernel: tpu_custom_call.1
$region0: #{tpu_custom_call.1}
  #allocation0 [shape = 'u32[]', space=smem, size = 0x4, offset = 0x4, fixed_abs, tag = 'smem constant byte address 0x4 - core index']
  #allocation1 [shape = 'u32[144,128]{1,0:T(1,128)}', space=vmem, size = 0x12000, scoped, tag = 'internal scratch']
  #allocation2 [shape = 'f32[8,32]{1,0:T(8,128)}', space=vmem, size = 0x1000, scoped, tag = 'scratch operand']
  %s0 = inlined_call_operand.hbm [shape: f32[8,16], index: 0, kind: input, shape index: {}]
  %s1 = inlined_call_operand.hbm [shape: f32[16,32], index: 1, kind: input, shape index: {}]
  %s2 = inlined_call_operand.vmem [shape: f32[1,32], index: 2, kind: input, shape index: {}]
  %s3 = inlined_call_operand.hbm [shape: f32[8,32], index: 3, kind: output, shape index: {}]
  %s4 = sld [smem:[#allocation0]]
  $region38: #{tpu_custom_call.1} parent=0
    _
  %s6 = ssub.s32 1, %s4
  %s7 = scalar_select 0, %s6, %s4
  $region1: #{tpu_custom_call.1} parent=0
    #allocation3 [shape = 'u8[4096]{0}', space=vmem, size = 0x1000, scoped, tag = 'input window, operand 0, single buffered']
    #allocation4 [shape = 's32[1]{0}', space=sflag, size = 0x4, scoped, tag = 'scoped memory for tpu_custom_call.1']
    #allocation5 [shape = 's32[1]{0}', space=sflag, size = 0x4, scoped, tag = 'scoped memory for tpu_custom_call.1']
    #allocation6 [shape = 'u8[8192]{0}', space=vmem, size = 0x2000, scoped, tag = 'input window, operand 1, single buffered']
    #allocation7 [shape = 's32[1]{0}', space=sflag, size = 0x4, scoped, tag = 'scoped memory for tpu_custom_call.1']
    #allocation8 [shape = 'u8[4096]{0}', space=vmem, size = 0x1000, scoped, tag = 'output window, operand 0, single buffered']
    %8 = vsyncpa [#allocation4], 0
    %9 = vsyncpa [#allocation7], 0
    %10 = vsyncpa [#allocation5], 0
    // Predicated region
    $region2: #{tpu_custom_call.1} parent=1 // pred_check
      _
    $region3: #{tpu_custom_call.1} parent=1 // pred_check_branch
      %12 = sbr.rel (0) target = $region5
    $region4: #{tpu_custom_call.1} parent=1 // pred_region
      %s14 = ssub.s32 128, 128
      %15 = vsyncadd [#allocation4], %s14
      %s17 = sshll.u32 [#allocation3], 4
      %s18 = int_to_ptr.vmem [resolvable:$true] %s17
      %20 = dma.hbm_to_vmem [thread:$0]  %s0, 128, %s18, [#allocation4]
    $region5: #{tpu_custom_call.1} parent=1 // pred_fallthru
      _
    // Predicated region
    $region6: #{tpu_custom_call.1} parent=1 // pred_check
      _
    $region7: #{tpu_custom_call.1} parent=1 // pred_check_branch
      %22 = sbr.rel (0) target = $region9
    $region8: #{tpu_custom_call.1} parent=1 // pred_region
      %s24 = ssub.s32 256, 256
      %25 = vsyncadd [#allocation7], %s24
      %s26 = sshll.u32 [#allocation6], 4
      %s27 = int_to_ptr.vmem [resolvable:$true] %s26
      %32 = dma.hbm_to_vmem [thread:$0]  %s1, 256, %s27, [#allocation7], 128, 128, 8
    $region9: #{tpu_custom_call.1} parent=1 // pred_fallthru
      _
    // Predicated region
    $region10: #{tpu_custom_call.1} parent=1 // pred_check
      _
    $region11: #{tpu_custom_call.1} parent=1 // pred_check_branch
      %34 = sbr.rel (0) target = $region13
    $region12: #{tpu_custom_call.1} parent=1 // pred_region
      _
    $region13: #{tpu_custom_call.1} parent=1 // pred_fallthru
      _
    // Predicated region
    $region14: #{tpu_custom_call.1} parent=1 // pred_check
      _
    $region15: #{tpu_custom_call.1} parent=1 // pred_check_branch
      %36 = sbr.rel (0) target = $region17
    $region16: #{tpu_custom_call.1} parent=1 // pred_region
      %37 = dma.done [#allocation4], 128
    $region17: #{tpu_custom_call.1} parent=1 // pred_fallthru
      _
    // Predicated region
    $region18: #{tpu_custom_call.1} parent=1 // pred_check
      _
    $region19: #{tpu_custom_call.1} parent=1 // pred_check_branch
      %39 = sbr.rel (0) target = $region21
    $region20: #{tpu_custom_call.1} parent=1 // pred_region
      %40 = dma.done [#allocation7], 256
    $region21: #{tpu_custom_call.1} parent=1 // pred_fallthru
      _
    %p41 = scmp.eq.s32.totalorder 0, 0
    // Predicated region
    $region22: #{tpu_custom_call.1} parent=1 // pred_check
      %p42 = pneg %p41
    $region23: #{tpu_custom_call.1} parent=1 // pred_check_branch
      %44 = sbr.rel (%p42) target = $region25
    $region24: #{tpu_custom_call.1} parent=1 // pred_region
      %vm45 = vcmask 261120
      %46 = vst.msk [vmem:[#allocation2] sm:$0xff] %vm45, 0.0
    $region25: #{tpu_custom_call.1} parent=1 // pred_fallthru
      _
    %v47 = vld [vmem:[#allocation2] sm:$0xff]
    %v48 = vld [vmem:[#allocation3] sm:$0xff]
    %v49 = vld [vmem:[#allocation6] sm:$0xff]
    %v50 = vld [vmem:[#allocation6 + $0x8] sm:$0xff]
    %vm51 = vcmask 130048
    %v53 = vsel %vm51, %v48, 0
    %55 = vmatprep.subr.mxu0 0.0
    %56 = vmatpush1.msra.mxu0 0.0
    %57 = vmatprep.subr.mxu0 0.0
    %58 = vmatpush1.msra.mxu0 0.0
    %59 = vmatprep.subr.mxu0 0.0
    %60 = vmatpush1.msra.mxu0 0.0
    %61 = vmatprep.subr.mxu0 0.0
    %62 = vmatpush1.msra.mxu0 0.0
    %63 = vmatprep.subr.mxu0 0.0
    %64 = vmatpush1.msra.mxu0 0.0
    %65 = vmatprep.subr.mxu0 0.0
    %66 = vmatpush1.msra.mxu0 0.0
    %67 = vmatprep.subr.mxu0 0.0
    %68 = vmatpush1.msra.mxu0 0.0
    %69 = vmatprep.subr.mxu0 0.0
    %70 = vmatpush1.msra.mxu0 0.0
    %71 = vmatprep.subr.mxu0 0.0
    %72 = vmatpush1.msra.mxu0 0.0
    %73 = vmatprep.subr.mxu0 0.0
    %74 = vmatpush1.msra.mxu0 0.0
    %75 = vmatprep.subr.mxu0 0.0
    %76 = vmatpush1.msra.mxu0 0.0
    %77 = vmatprep.subr.mxu0 0.0
    %78 = vmatpush1.msra.mxu0 0.0
    %79 = vmatprep.subr.mxu0 0.0
    %80 = vmatpush1.msra.mxu0 0.0
    %81 = vmatprep.subr.mxu0 0.0
    %82 = vmatpush1.msra.mxu0 0.0
    %83 = vmatprep.subr.mxu0 0.0
    %84 = vmatpush1.msra.mxu0 %v50
    %85 = vmatprep.subr.mxu0 0.0
    %86 = vmatpush1.msra.mxu0 %v49
    %87 = vmatprep.subr.mxu0 0.0
    %88 = vmatpush2.msra.mxu0 0.0
    %89 = vmatprep.subr.mxu0 0.0
    %90 = vmatpush2.msra.mxu0 0.0
    %91 = vmatprep.subr.mxu0 0.0
    %92 = vmatpush2.msra.mxu0 0.0
    %93 = vmatprep.subr.mxu0 0.0
    %94 = vmatpush2.msra.mxu0 0.0
    %95 = vmatprep.subr.mxu0 0.0
    %96 = vmatpush2.msra.mxu0 0.0
    %97 = vmatprep.subr.mxu0 0.0
    %98 = vmatpush2.msra.mxu0 0.0
    %99 = vmatprep.subr.mxu0 0.0
    %100 = vmatpush2.msra.mxu0 0.0
    %101 = vmatprep.subr.mxu0 0.0
    %102 = vmatpush2.msra.mxu0 0.0
    %103 = vmatprep.subr.mxu0 0.0
    %104 = vmatpush2.msra.mxu0 0.0
    %105 = vmatprep.subr.mxu0 0.0
    %106 = vmatpush2.msra.mxu0 0.0
    %107 = vmatprep.subr.mxu0 0.0
    %108 = vmatpush2.msra.mxu0 0.0
    %109 = vmatprep.subr.mxu0 0.0
    %110 = vmatpush2.msra.mxu0 0.0
    %111 = vmatprep.subr.mxu0 0.0
    %112 = vmatpush2.msra.mxu0 0.0
    %113 = vmatprep.subr.mxu0 0.0
    %114 = vmatpush2.msra.mxu0 0.0
    %115 = vmatprep.subr.mxu0 0.0
    %116 = vmatpush2.msra.mxu0 0.0
    %117 = vmatprep.subr.mxu0 0.0
    %118 = vmatpush2.msra.mxu0 0.0
    %119 = vmatprep.mubr.f32.mxu0 0.0
    %120 = vmatmul.mubr.f32.gmra.mxu0 %v53
    %v121 = vpop.f32.mrf.mxu0
    %v122 = vadd.f32 0.0, %v121
    %v123 = vpop.f32.mrf.mxu0
    %124 = vdwg.mxu0
    %v125 = vadd.f32 %v47, %v122
    %vm126 = vcmask 261120
    %127 = vst.msk [vmem:[#allocation2] sm:$0xff] %vm126, %v125
    // Predicated region
    $region26: #{tpu_custom_call.1} parent=1 // pred_check
      %p128 = pneg %p41
    $region27: #{tpu_custom_call.1} parent=1 // pred_check_branch
      %130 = sbr.rel (%p128) target = $region29
    $region28: #{tpu_custom_call.1} parent=1 // pred_region
      %v131 = vld [vmem:[#allocation2] sm:$0xff]
      %v132 = vld [vmem:[%s2] sm:$0x1]
      %v134 = vlaneseq
      %v135 = vshrl.u32 %v134, 7
      %v136 = vsub.s32 0, %v135
      %v137 = vrot.slane %v132, %v136
      %v139 = vadd.f32 %v131, %v137
      %v140 = vmul.f32 %v139, 0.5
      %v141 = vmul.f32 %v139, 0.70710677
      %v142 = verf.f32.pop %v141
      %v143 = vadd.f32 %v142, 1.0
      %v144 = vmul.f32 %v140, %v143
      %145 = vst.msk [vmem:[#allocation8] sm:$0xff] %vm126, %v144
    $region29: #{tpu_custom_call.1} parent=1 // pred_fallthru
      _
    // Predicated region
    $region30: #{tpu_custom_call.1} parent=1 // pred_check
      _
    $region31: #{tpu_custom_call.1} parent=1 // pred_check_branch
      %147 = sbr.rel (0) target = $region33
    $region32: #{tpu_custom_call.1} parent=1 // pred_region
      %s149 = ssub.s32 128, 128
      %150 = vsyncadd [#allocation5], %s149
      %s152 = sshll.u32 [#allocation8], 4
      %s153 = int_to_ptr.vmem [resolvable:$true] %s152
      %155 = dma.vmem_to_hbm [thread:$0]  %s153, 128, %s3, [#allocation5]
    $region33: #{tpu_custom_call.1} parent=1 // pred_fallthru
      _
    // Predicated region
    $region34: #{tpu_custom_call.1} parent=1 // pred_check
      _
    $region35: #{tpu_custom_call.1} parent=1 // pred_check_branch
      %157 = sbr.rel (0) target = $region37
    $region36: #{tpu_custom_call.1} parent=1 // pred_region
      %158 = dma.done [#allocation5], 128
    $region37: #{tpu_custom_call.1} parent=1 // pred_fallthru
      _
    %159 = vsyncpa [#allocation4], 1
    %160 = vsyncpa [#allocation7], 1
    %161 = vsyncpa [#allocation5], 1

</llo_original>
